<compile_context>
chip_gen: v7x
topology: tpu7x:2x2x1
jax: 0.10.0
libtpu: 0.0.40
codegen_flags: <defaults>
</compile_context>

<pallas_src>
import functools
import math

import jax
import jax.numpy as jnp
from jax.experimental import pallas as pl
from jax.experimental.pallas import tpu as pltpu


def _round_up(x, m):
    return ((x + m - 1) // m) * m


# ---------------------------------------------------------------------------
# Pallas kernel: fully fused MLP decoder (all layers in one kernel body)
# ---------------------------------------------------------------------------
def _fused_mlp_kernel(x_ref, w_ref, b_ref, o_ref, *, num_layers, k_pad):
    x = x_ref[...]                                     # bf16 (TB, k_pad), lane-dense
    out = None
    for i in range(num_layers):                        # static Python loop (unrolled)
        w = w_ref[i]                                   # bf16 (k_pad, n_pad), static sub-view
        b = b_ref[i]                                   # f32  (1, n_pad)
        y = jnp.dot(x, w, preferred_element_type=jnp.float32) + b
        if i != num_layers - 1:
            y = jnp.maximum(y, 0.0)                    # f32 epilogue (v5e has no bf16 VPU)
            x = y[:, :k_pad].astype(jnp.bfloat16)      # bf16 operands for next MXU pass
        else:
            out = y
    o_ref[...] = out.astype(o_ref.dtype)               # single lane-dense store


def fused_mlp_pallas(x_pad, w_packed, b_packed, *, num_layers, cost_flops, cost_bytes):
    """x_pad: (B_pad, K_pad) bf16; w_packed: (L, K_pad, N_pad) bf16; b_packed: (L, 1, N_pad) f32."""
    B_pad, k_pad = x_pad.shape
    L, k_pad_w, n_pad = w_packed.shape
    assert L == num_layers and k_pad_w == k_pad

    tb = B_pad if B_pad <= 512 else 512                # batch (row) tile; sized well under
    assert B_pad % tb == 0                             # v7x's 64 MiB VMEM even when streamed
    grid = (B_pad // tb,)

    kernel = functools.partial(_fused_mlp_kernel, num_layers=num_layers, k_pad=k_pad)

    return pl.pallas_call(
        kernel,
        out_shape=jax.ShapeDtypeStruct((B_pad, n_pad), jnp.float32),
        grid_spec=pltpu.PrefetchScalarGridSpec(
            num_scalar_prefetch=0,
            grid=grid,
            in_specs=[
                pl.BlockSpec((tb, k_pad), lambda i: (i, 0)),
                # constant block index -> weights/biases stay VMEM-resident across steps
                pl.BlockSpec((L, k_pad, n_pad), lambda i: (0, 0, 0)),
                pl.BlockSpec((L, 1, n_pad), lambda i: (0, 0, 0)),
            ],
            out_specs=pl.BlockSpec((tb, n_pad), lambda i: (i, 0)),
        ),
        compiler_params=pltpu.CompilerParams(dimension_semantics=("parallel",)),
        cost_estimate=pl.CostEstimate(
            flops=cost_flops, transcendentals=0, bytes_accessed=cost_bytes
        ),
    )(x_pad, w_packed, b_packed)


# ---------------------------------------------------------------------------
# ModuleDecoder in JAX
# ---------------------------------------------------------------------------
def make_mlp_params(key, in_dim, out_dim, hidden_dim, num_layers):
    """Deterministic init with the same layer structure as the PyTorch MLP.
    Weights stored as (in_dim, out_dim) — transpose of nn.Linear's (out, in)."""
    if num_layers == 1:
        dims = [(in_dim, out_dim)]
    else:
        dims = [(in_dim, hidden_dim)]
        dims += [(hidden_dim, hidden_dim)] * (num_layers - 2)
        dims += [(hidden_dim, out_dim)]
    params = []
    for li, (din, dout) in enumerate(dims):
        kw, kb = jax.random.split(jax.random.fold_in(key, li))
        scale = 1.0 / math.sqrt(din)
        w = jax.random.uniform(kw, (din, dout), jnp.float32, -1.0, 1.0) * scale
        b = jax.random.uniform(kb, (dout,), jnp.float32, -1.0, 1.0) * scale
        params.append((w, b))
    return params


def prepare_packed_params(params, k_pad, n_pad):
    """One-time prep: zero-pad every layer's W to (k_pad, n_pad) / b to (n_pad,) and
    stack into ONE bf16 weight block and ONE f32 bias block (2 kernel inputs total).
    Zero rows/cols are numerically inert (zero K-rows contribute 0; ReLU(0)=0)."""
    ws, bs = [], []
    for (w, b) in params:
        din, dout = w.shape
        wp = jnp.zeros((k_pad, n_pad), jnp.float32).at[:din, :dout].set(w)
        bp = jnp.zeros((n_pad,), jnp.float32).at[:dout].set(b)
        ws.append(wp.astype(jnp.bfloat16))
        bs.append(bp)
    w_packed = jnp.stack(ws)                   # (L, k_pad, n_pad) bf16
    b_packed = jnp.stack(bs)[:, None, :]       # (L, 1, n_pad)     f32
    return w_packed, b_packed


def mlp_reference_f32(params, x):
    """Pure-JAX f32 reference of the decoder MLP (for correctness checking)."""
    n = len(params)
    for i, (w, b) in enumerate(params):
        x = x @ w + b
        if i != n - 1:
            x = jnp.maximum(x, 0.0)
    return x


def make_module_decoder_forward(name_shape_dict, param_cnt, decoder_params):
    """Builds a jitted forward: weight_vec (B, weight_dim) -> {name: (B, *shape)}."""
    num_layers = len(decoder_params)
    in_dim = decoder_params[0][0].shape[0]
    hidden_dim = decoder_params[0][0].shape[1] if num_layers > 1 else 0

    k_pad = _round_up(max(in_dim, hidden_dim, 1), 128)          # lane-dense input/hidden
    n_pad = _round_up(max(hidden_dim, param_cnt, 1), 128)       # lane-dense hidden/output
    # Kernel re-slices intermediates to k_pad lanes; needs k_pad <= n_pad.
    assert k_pad <= n_pad, "unsupported dim combination for packed layout"

    w_packed, b_packed = prepare_packed_params(decoder_params, k_pad, n_pad)

    layer_dims = [(w.shape[0], w.shape[1]) for (w, _) in decoder_params]
    chunk_sizes = [int(math.prod(s)) for s in name_shape_dict.values()]
    split_idx = []
    acc = 0
    for c in chunk_sizes[:-1]:
        acc += c
        split_idx.append(acc)
    names_shapes = list(name_shape_dict.items())

    @jax.jit
    def forward(weight_vec):
        B, din = weight_vec.shape
        # Pad batch (sublane axis) so bf16 vregs are fully packed; pad features to k_pad lanes.
        B_pad = max(16, _round_up(B, 16))
        if B_pad > 512:
            B_pad = _round_up(B_pad, 512)
        x_pad = jnp.zeros((B_pad, k_pad), jnp.bfloat16).at[:B, :din].set(
            weight_vec.astype(jnp.bfloat16)
        )

        # Advisory cost on REAL (unpadded) batch / dims.
        flops = sum(2 * B * d_in * d_out for (d_in, d_out) in layer_dims)
        bytes_accessed = (
            B * din * 2                      # input (bf16)
            + B * param_cnt * 4              # output (f32)
            + w_packed.size * 2              # packed weights (bf16)
            + b_packed.size * 4              # packed biases (f32)
        )

        decoded_pad = fused_mlp_pallas(
            x_pad, w_packed, b_packed,
            num_layers=num_layers, cost_flops=flops, cost_bytes=bytes_accessed,
        )                                                   # (B_pad, n_pad) f32
        decoded = decoded_pad[:B, :param_cnt]               # strip row/lane padding (fused glue)

        # Split flat parameter vector into per-parameter chunks and reshape.
        weight_chunks = jnp.split(decoded, split_idx, axis=-1)
        return {
            k: chunk.reshape(-1, *shape)
            for chunk, (k, shape) in zip(weight_chunks, names_shapes)
        }

    return forward


# ---------------------------------------------------------------------------
# Main
# ---------------------------------------------------------------------------
if __name__ == "__main__":
    # Synthetic "target_net": a small 2-layer MLP (8 -> 16 -> 4), whose
    # named_parameters define the shapes the decoder must emit.
    name_shape_dict = {
        "fc1.weight": (16, 8),
        "fc1.bias": (16,),
        "fc2.weight": (4, 16),
        "fc2.bias": (4,),
    }
    param_cnt = sum(int(math.prod(s)) for s in name_shape_dict.values())  # 212

    weight_dim = 32
    hidden_dim = 64
    num_layers = 3
    batch = 2

    key = jax.random.PRNGKey(0)
    k_params, k_input = jax.random.split(key)

    decoder_params = make_mlp_params(k_params, weight_dim, param_cnt, hidden_dim, num_layers)
    decoder_forward = make_module_decoder_forward(name_shape_dict, param_cnt, decoder_params)

    weight_vec = jax.random.normal(k_input, (batch, weight_dim), jnp.float32)

    out = decoder_forward(weight_vec)
    out = jax.block_until_ready(out)

    # Shape check: matches PyTorch's chunk.reshape(-1, *v) semantics.
    for k, shape in name_shape_dict.items():
        assert out[k].shape == (batch,) + shape, (k, out[k].shape)

    # Numeric sanity check against a pure-JAX f32 reference (loose tolerance for
    # bf16 operands with f32 accumulation).
    # TODO(synk): keep inter-layer activations in f32 if decoded weights prove
    # numerically sensitive (negligible cost at this size).
    ref_flat = mlp_reference_f32(decoder_params, weight_vec)  # (B, param_cnt)
    got_flat = jnp.concatenate(
        [out[k].reshape(batch, -1) for k in name_shape_dict], axis=-1
    )
    assert jnp.allclose(got_flat, ref_flat, rtol=1e-1, atol=1e-1), (
        float(jnp.max(jnp.abs(got_flat - ref_flat)))
    )

    print("KERNEL_OK")
</pallas_src>

<mosaic_0001>
module attributes {stable_mosaic.version = 11 : i64} {
  func.func @_fused_mlp_kernel(%arg0: i32, %arg1: memref<16x128xbf16, #tpu.memory_space<vmem>>, %arg2: memref<3x128x256xbf16, #tpu.memory_space<vmem>>, %arg3: memref<3x1x256xf32, #tpu.memory_space<vmem>>, %arg4: memref<16x256xf32, #tpu.memory_space<vmem>>) attributes {dimension_semantics = [#tpu.dimension_semantics<parallel>], iteration_bounds = array<i64: 1>, scalar_prefetch = 0 : i64, scratch_operands = 0 : i64, tpu.core_type = #tpu.core_type<tc>, window_params = [{transform_indices = @transform_0, window_bounds = array<i64: 16, 128>}, {pipeline_mode = #tpu.pipeline_mode<synchronous>, transform_indices = @transform_1, window_bounds = array<i64: 3, 128, 256>}, {pipeline_mode = #tpu.pipeline_mode<synchronous>, transform_indices = @transform_2, window_bounds = array<i64: 3, 1, 256>}, {transform_indices = @transform_3, window_bounds = array<i64: 16, 256>}]} {
    %c0 = arith.constant 0 : index
    %c0_0 = arith.constant 0 : index
    %0 = vector.load %arg1[%c0, %c0_0] : memref<16x128xbf16, #tpu.memory_space<vmem>>, vector<16x128xbf16>
    %c0_1 = arith.constant 0 : index
    %c0_2 = arith.constant 0 : index
    %c0_3 = arith.constant 0 : index
    %1 = vector.load %arg2[%c0_1, %c0_2, %c0_3] : memref<3x128x256xbf16, #tpu.memory_space<vmem>>, vector<1x128x256xbf16>
    %2 = vector.shape_cast %1 : vector<1x128x256xbf16> to vector<128x256xbf16>
    %c0_4 = arith.constant 0 : index
    %c0_5 = arith.constant 0 : index
    %c0_6 = arith.constant 0 : index
    %3 = vector.load %arg3[%c0_4, %c0_5, %c0_6] : memref<3x1x256xf32, #tpu.memory_space<vmem>>, vector<1x1x256xf32>
    %4 = vector.shape_cast %3 : vector<1x1x256xf32> to vector<1x256xf32>
    %cst = arith.constant dense<0.000000e+00> : vector<16x256xf32>
    %5 = tpu.matmul %0, %2, %cst {dimension_numbers = #tpu.dot_dimension_numbers<[1], [0], [0], [1], [0, 0, 1, 1], [], []>} : vector<16x128xbf16>, vector<128x256xbf16>, vector<16x256xf32> -> vector<16x256xf32>
    %6 = vector.broadcast %4 : vector<1x256xf32> to vector<16x256xf32>
    %7 = arith.addf %5, %6 : vector<16x256xf32>
    %cst_7 = arith.constant 0.000000e+00 : f32
    %8 = vector.broadcast %cst_7 : f32 to vector<16x256xf32>
    %9 = arith.maximumf %7, %8 : vector<16x256xf32>
    %10 = vector.extract_strided_slice %9 {offsets = [0, 0], sizes = [16, 128], strides = [1, 1]} : vector<16x256xf32> to vector<16x128xf32>
    %11 = arith.truncf %10 : vector<16x128xf32> to vector<16x128xbf16>
    %c1 = arith.constant 1 : index
    %c0_8 = arith.constant 0 : index
    %c0_9 = arith.constant 0 : index
    %12 = vector.load %arg2[%c1, %c0_8, %c0_9] : memref<3x128x256xbf16, #tpu.memory_space<vmem>>, vector<1x128x256xbf16>
    %13 = vector.shape_cast %12 : vector<1x128x256xbf16> to vector<128x256xbf16>
    %c1_10 = arith.constant 1 : index
    %c0_11 = arith.constant 0 : index
    %c0_12 = arith.constant 0 : index
    %14 = vector.load %arg3[%c1_10, %c0_11, %c0_12] : memref<3x1x256xf32, #tpu.memory_space<vmem>>, vector<1x1x256xf32>
    %15 = vector.shape_cast %14 : vector<1x1x256xf32> to vector<1x256xf32>
    %cst_13 = arith.constant dense<0.000000e+00> : vector<16x256xf32>
    %16 = tpu.matmul %11, %13, %cst_13 {dimension_numbers = #tpu.dot_dimension_numbers<[1], [0], [0], [1], [0, 0, 1, 1], [], []>} : vector<16x128xbf16>, vector<128x256xbf16>, vector<16x256xf32> -> vector<16x256xf32>
    %17 = vector.broadcast %15 : vector<1x256xf32> to vector<16x256xf32>
    %18 = arith.addf %16, %17 : vector<16x256xf32>
    %cst_14 = arith.constant 0.000000e+00 : f32
    %19 = vector.broadcast %cst_14 : f32 to vector<16x256xf32>
    %20 = arith.maximumf %18, %19 : vector<16x256xf32>
    %21 = vector.extract_strided_slice %20 {offsets = [0, 0], sizes = [16, 128], strides = [1, 1]} : vector<16x256xf32> to vector<16x128xf32>
    %22 = arith.truncf %21 : vector<16x128xf32> to vector<16x128xbf16>
    %c2 = arith.constant 2 : index
    %c0_15 = arith.constant 0 : index
    %c0_16 = arith.constant 0 : index
    %23 = vector.load %arg2[%c2, %c0_15, %c0_16] : memref<3x128x256xbf16, #tpu.memory_space<vmem>>, vector<1x128x256xbf16>
    %24 = vector.shape_cast %23 : vector<1x128x256xbf16> to vector<128x256xbf16>
    %c2_17 = arith.constant 2 : index
    %c0_18 = arith.constant 0 : index
    %c0_19 = arith.constant 0 : index
    %25 = vector.load %arg3[%c2_17, %c0_18, %c0_19] : memref<3x1x256xf32, #tpu.memory_space<vmem>>, vector<1x1x256xf32>
    %26 = vector.shape_cast %25 : vector<1x1x256xf32> to vector<1x256xf32>
    %cst_20 = arith.constant dense<0.000000e+00> : vector<16x256xf32>
    %27 = tpu.matmul %22, %24, %cst_20 {dimension_numbers = #tpu.dot_dimension_numbers<[1], [0], [0], [1], [0, 0, 1, 1], [], []>} : vector<16x128xbf16>, vector<128x256xbf16>, vector<16x256xf32> -> vector<16x256xf32>
    %28 = vector.broadcast %26 : vector<1x256xf32> to vector<16x256xf32>
    %29 = arith.addf %27, %28 : vector<16x256xf32>
    %c0_21 = arith.constant 0 : index
    %c0_22 = arith.constant 0 : index
    %30 = vector.load %arg4[%c0_21, %c0_22] : memref<16x256xf32, #tpu.memory_space<vmem>>, vector<16x256xf32>
    tpu.vector_store %arg4[%c0_21, %c0_22], %29 {strides = array<i32>} : memref<16x256xf32, #tpu.memory_space<vmem>>, vector<16x256xf32>,
    return
  }
  func.func @transform_0(%arg0: i32) -> (i32, i32) {
    %c0_i32 = arith.constant 0 : i32
    %c0_i32_0 = arith.constant 0 : i32
    return %arg0, %c0_i32 : i32, i32
  }
  func.func @transform_1(%arg0: i32) -> (i32, i32, i32) {
    %c0_i32 = arith.constant 0 : i32
    %c0_i32_0 = arith.constant 0 : i32
    %c0_i32_1 = arith.constant 0 : i32
    %c0_i32_2 = arith.constant 0 : i32
    return %c0_i32, %c0_i32_0, %c0_i32_1 : i32, i32, i32
  }
  func.func @transform_2(%arg0: i32) -> (i32, i32, i32) {
    %c0_i32 = arith.constant 0 : i32
    %c0_i32_0 = arith.constant 0 : i32
    %c0_i32_1 = arith.constant 0 : i32
    %c0_i32_2 = arith.constant 0 : i32
    return %c0_i32, %c0_i32_0, %c0_i32_1 : i32, i32, i32
  }
  func.func @transform_3(%arg0: i32) -> (i32, i32) {
    %c0_i32 = arith.constant 0 : i32
    %c0_i32_0 = arith.constant 0 : i32
    return %arg0, %c0_i32 : i32, i32
  }
}

</mosaic_0001>

<llo_original>
// kernel: split.1
$region0: #{split.1}
  #allocation0 [shape = 'u32[2048]{0}', space=vmem, size = 0x2000, scoped, tag = 'scoped memory for split.1']
  #allocation1 [shape = 'u32[2048]{0}', space=vmem, size = 0x2000, scoped, tag = 'scoped memory for split.1']
  #allocation2 [shape = 'u32[2048]{0}', space=vmem, size = 0x2000, scoped, tag = 'scoped memory for split.1']
  #allocation3 [shape = 'u32[2048]{0}', space=vmem, size = 0x2000, scoped, tag = 'scoped memory for split.1']
  #allocation4 [shape = 'u32[2048]{0}', space=vmem, size = 0x2000, scoped, tag = 'scoped memory for split.1']
  #allocation5 [shape = 's32[1]{0}', space=sflag, size = 0x4, scoped, tag = 'scoped memory for split.1']
  %s0 = inlined_call_operand.vmem [shape: f32[16,256], index: 0, kind: input, shape index: {}]
  %s1 = inlined_call_operand.vmem [shape: f32[2,128], index: 1, kind: output, shape index: {}]
  %v2 = vld [vmem:[%s0] sm:$0xff]
  %3 = vst [vmem:[%s1] sm:$0x3] %v2

// kernel: split.2
$region0: #{split.2}
  #allocation0 [shape = 'u32[2048]{0}', space=vmem, size = 0x2000, scoped, tag = 'scoped memory for split.2']
  #allocation1 [shape = 'u32[2048]{0}', space=vmem, size = 0x2000, scoped, tag = 'scoped memory for split.2']
  #allocation2 [shape = 'u32[2048]{0}', space=vmem, size = 0x2000, scoped, tag = 'scoped memory for split.2']
  #allocation3 [shape = 'u32[2048]{0}', space=vmem, size = 0x2000, scoped, tag = 'scoped memory for split.2']
  #allocation4 [shape = 'u32[2048]{0}', space=vmem, size = 0x2000, scoped, tag = 'scoped memory for split.2']
  #allocation7 [shape = 's32[1]{0}', space=sflag, size = 0x4, scoped, tag = 'scoped memory for split.2']
  %s0 = inlined_call_operand.vmem [shape: f32[16,256], index: 0, kind: input, shape index: {}]
  %s1 = inlined_call_operand.hbm [shape: f32[2,4], index: 1, kind: output, shape index: {}]
  $region1: #{split.2} parent=0
    #allocation5 [shape = 'u8[1024]{0}', space=vmem, size = 0x400, scoped, tag = 'operand span for operand 1']
    #allocation6 [shape = 's32[1]{0}', space=sflag, size = 0x4, scoped, tag = 'scoped memory for split.2']
    %2 = vsyncpa [#allocation6], 0
    %s3 = scalar_lea.vmem %s0, 8
    %s4 = scalar_lea.vmem %s0, 8
    %s5 = scalar_lea.vmem %s0, 8
    %v6 = vld [vmem:[%s5] sm:$0xff]
    %v7 = vlaneseq
    %v8 = vand.u32 %v7, 127
    %vm9 = vcmp.lt.s32.totalorder %v8, 80
    %v10 = vsel %vm9, 0, %v6
    %11 = vrot.lane.b32.xlu0 %v10, 48
    %v12 = vpop.permute.xlu0 %11
    %13 = vst [vmem:[#allocation5] sm:$0x3] %v12
    %s15 = ssub.s32 32, 32
    %16 = vsyncadd [#allocation6], %s15
    %s18 = sshll.u32 [#allocation5], 4
    %s19 = int_to_ptr.vmem [resolvable:$true] %s18
    %21 = dma.vmem_to_hbm [thread:$0]  %s19, 32, %s1, [#allocation6]
    %22 = dma.done [#allocation6], 32
    %23 = vsyncpa [#allocation6], 1

// kernel: split.0
$region0: #{split.0}
  #allocation0 [shape = 'u32[2048]{0}', space=vmem, size = 0x2000, scoped, tag = 'scoped memory for split.0']
  #allocation1 [shape = 'u32[2048]{0}', space=vmem, size = 0x2000, scoped, tag = 'scoped memory for split.0']
  #allocation2 [shape = 'u32[2048]{0}', space=vmem, size = 0x2000, scoped, tag = 'scoped memory for split.0']
  #allocation3 [shape = 'u32[2048]{0}', space=vmem, size = 0x2000, scoped, tag = 'scoped memory for split.0']
  #allocation4 [shape = 'u32[2048]{0}', space=vmem, size = 0x2000, scoped, tag = 'scoped memory for split.0']
  #allocation7 [shape = 's32[1]{0}', space=sflag, size = 0x4, scoped, tag = 'scoped memory for split.0']
  %s0 = inlined_call_operand.vmem [shape: f32[16,256], index: 0, kind: input, shape index: {}]
  %s1 = inlined_call_operand.hbm [shape: f32[2,16], index: 1, kind: output, shape index: {}]
  $region1: #{split.0} parent=0
    #allocation5 [shape = 'u8[1024]{0}', space=vmem, size = 0x400, scoped, tag = 'operand span for operand 1']
    #allocation6 [shape = 's32[1]{0}', space=sflag, size = 0x4, scoped, tag = 'scoped memory for split.0']
    %2 = vsyncpa [#allocation6], 0
    %s3 = scalar_lea.vmem %s0, 8
    %s4 = scalar_lea.vmem %s0, 8
    %s5 = scalar_lea.vmem %s0, 8
    %v6 = vld [vmem:[%s5] sm:$0xff]
    %7 = vst [vmem:[#allocation5] sm:$0x3] %v6
    %s9 = ssub.s32 32, 32
    %10 = vsyncadd [#allocation6], %s9
    %s12 = sshll.u32 [#allocation5], 4
    %s13 = int_to_ptr.vmem [resolvable:$true] %s12
    %15 = dma.vmem_to_hbm [thread:$0]  %s13, 32, %s1, [#allocation6]
    %16 = dma.done [#allocation6], 32
    %17 = vsyncpa [#allocation6], 1

// kernel: split.3
$region0: #{split.3}
  #allocation0 [shape = 'u32[2048]{0}', space=vmem, size = 0x2000, scoped, tag = 'scoped memory for split.3']
  #allocation1 [shape = 'u32[2048]{0}', space=vmem, size = 0x2000, scoped, tag = 'scoped memory for split.3']
  #allocation2 [shape = 'u32[2048]{0}', space=vmem, size = 0x2000, scoped, tag = 'scoped memory for split.3']
  #allocation3 [shape = 'u32[2048]{0}', space=vmem, size = 0x2000, scoped, tag = 'scoped memory for split.3']
  #allocation4 [shape = 'u32[2048]{0}', space=vmem, size = 0x2000, scoped, tag = 'scoped memory for split.3']
  #allocation5 [shape = 's32[1]{0}', space=sflag, size = 0x4, scoped, tag = 'scoped memory for split.3']
  %s0 = inlined_call_operand.vmem [shape: f32[16,256], index: 0, kind: input, shape index: {}]
  %s1 = inlined_call_operand.vmem [shape: f32[2,64], index: 1, kind: output, shape index: {}]
  %s2 = scalar_lea.vmem %s0, 8
  %s3 = scalar_lea.vmem %s0, 8
  %s4 = scalar_lea.vmem %s0, 8
  %v5 = vld [vmem:[%s4] sm:$0xff]
  %v6 = vlaneseq
  %v7 = vand.u32 %v6, 127
  %vm8 = vcmp.lt.s32.totalorder %v7, 16
  %v9 = vsel %vm8, 0, %v5
  %10 = vrot.lane.b32.xlu0 %v9, 112
  %v11 = vpop.permute.xlu0 %10
  %12 = vst [vmem:[%s1] sm:$0x3] %v11

// kernel: forward.1
$region0: #{forward.1}
  #allocation0 [shape = 'u32[]', space=smem, size = 0x4, offset = 0x4, fixed_abs, tag = 'smem constant byte address 0x4 - core index']
  #allocation1 [shape = 'u32[144,128]{1,0:T(1,128)}', space=vmem, size = 0x12000, scoped, tag = 'internal scratch']
  %s0 = inlined_call_operand.vmem [shape: bf16[16,128], index: 0, kind: input, shape index: {}]
  %s1 = inlined_call_operand.vmem [shape: bf16[3,128,256], index: 1, kind: input, shape index: {}]
  %s2 = inlined_call_operand.vmem [shape: f32[3,1,256], index: 2, kind: input, shape index: {}]
  %s3 = inlined_call_operand.vmem [shape: f32[16,256], index: 3, kind: output, shape index: {}]
  %s4 = sld [smem:[#allocation0]]
  $region22: #{forward.1} parent=0
    _
  %s6 = ssub.s32 1, %s4
  %s7 = scalar_select 0, %s6, %s4
  // Predicated region
  $region2: #{forward.1} parent=0 // pred_check
    _
  $region3: #{forward.1} parent=0 // pred_check_branch
    %9 = sbr.rel (0) target = $region5
  $region4: #{forward.1} parent=0 // pred_region
    _
  $region5: #{forward.1} parent=0 // pred_fallthru
    _
  // Predicated region
  $region6: #{forward.1} parent=0 // pred_check
    _
  $region7: #{forward.1} parent=0 // pred_check_branch
    %11 = sbr.rel (0) target = $region9
  $region8: #{forward.1} parent=0 // pred_region
    _
  $region9: #{forward.1} parent=0 // pred_fallthru
    _
  // Predicated region
  $region10: #{forward.1} parent=0 // pred_check
    _
  $region11: #{forward.1} parent=0 // pred_check_branch
    %13 = sbr.rel (0) target = $region13
  $region12: #{forward.1} parent=0 // pred_region
    _
  $region13: #{forward.1} parent=0 // pred_fallthru
    _
  %v15 = vld [vmem:[%s0] sm:$0xf]
  %v16 = vld [vmem:[%s0 + $0x4] sm:$0xf]
  %v17 = vld [vmem:[%s1] sm:$0xff]
  %v18 = vld [vmem:[%s1 + $0x8] sm:$0xff]
  %v19 = vld [vmem:[%s1 + $0x10] sm:$0xff]
  %v20 = vld [vmem:[%s1 + $0x18] sm:$0xff]
  %v21 = vld [vmem:[%s1 + $0x20] sm:$0xff]
  %v22 = vld [vmem:[%s1 + $0x28] sm:$0xff]
  %v23 = vld [vmem:[%s1 + $0x30] sm:$0xff]
  %v24 = vld [vmem:[%s1 + $0x38] sm:$0xff]
  %v25 = vld [vmem:[%s1 + $0x40] sm:$0xff]
  %v26 = vld [vmem:[%s1 + $0x48] sm:$0xff]
  %v27 = vld [vmem:[%s1 + $0x50] sm:$0xff]
  %v28 = vld [vmem:[%s1 + $0x58] sm:$0xff]
  %v29 = vld [vmem:[%s1 + $0x60] sm:$0xff]
  %v30 = vld [vmem:[%s1 + $0x68] sm:$0xff]
  %v31 = vld [vmem:[%s1 + $0x70] sm:$0xff]
  %v32 = vld [vmem:[%s1 + $0x78] sm:$0xff]
  %v33 = vld [vmem:[%s2] sm:$0x3]
  %v35 = vlaneseq
  %v36 = vshrl.u32 %v35, 7
  %v37 = vsub.s32 0, %v36
  %v38 = vrot.slane %v33, %v37
  %v42 = vunpack.c.l.b16 %v15
  %v43 = vunpack.c.l.b16 %v16
  %v44 = vpack.c.b16 %v43, %v42
  %v62 = vunpack.c.l.b16 %v17
  %v63 = vunpack.c.h.b16 %v17
  %v64 = vunpack.c.l.b16 %v18
  %v65 = vunpack.c.h.b16 %v18
  %v66 = vunpack.c.l.b16 %v19
  %v67 = vunpack.c.h.b16 %v19
  %v68 = vunpack.c.l.b16 %v20
  %v69 = vunpack.c.h.b16 %v20
  %v70 = vunpack.c.l.b16 %v21
  %v71 = vunpack.c.h.b16 %v21
  %v72 = vunpack.c.l.b16 %v22
  %v73 = vunpack.c.h.b16 %v22
  %v74 = vunpack.c.l.b16 %v23
  %v75 = vunpack.c.h.b16 %v23
  %v76 = vunpack.c.l.b16 %v24
  %v77 = vunpack.c.h.b16 %v24
  %v78 = vunpack.c.l.b16 %v25
  %v79 = vunpack.c.h.b16 %v25
  %v80 = vunpack.c.l.b16 %v26
  %v81 = vunpack.c.h.b16 %v26
  %v82 = vunpack.c.l.b16 %v27
  %v83 = vunpack.c.h.b16 %v27
  %v84 = vunpack.c.l.b16 %v28
  %v85 = vunpack.c.h.b16 %v28
  %v86 = vunpack.c.l.b16 %v29
  %v87 = vunpack.c.h.b16 %v29
  %v88 = vunpack.c.l.b16 %v30
  %v89 = vunpack.c.h.b16 %v30
  %v90 = vunpack.c.l.b16 %v31
  %v91 = vunpack.c.h.b16 %v31
  %v92 = vunpack.c.l.b16 %v32
  %v93 = vunpack.c.h.b16 %v32
  %v94 = vpack.c.b16 %v64, %v62
  %v95 = vpack.c.b16 %v65, %v63
  %v96 = vpack.c.b16 %v68, %v66
  %v97 = vpack.c.b16 %v69, %v67
  %v98 = vpack.c.b16 %v72, %v70
  %v99 = vpack.c.b16 %v73, %v71
  %v100 = vpack.c.b16 %v76, %v74
  %v101 = vpack.c.b16 %v77, %v75
  %v102 = vpack.c.b16 %v80, %v78
  %v103 = vpack.c.b16 %v81, %v79
  %v104 = vpack.c.b16 %v84, %v82
  %v105 = vpack.c.b16 %v85, %v83
  %v106 = vpack.c.b16 %v88, %v86
  %v107 = vpack.c.b16 %v89, %v87
  %v108 = vpack.c.b16 %v92, %v90
  %v109 = vpack.c.b16 %v93, %v91
  %126 = vmatprep.subr.bf16.mxu0 %v95
  %127 = vmatpush1.bf16.msra.mxu0 %v94
  %128 = vmatprep.subr.bf16.mxu0 %v97
  %129 = vmatpush1.bf16.msra.mxu0 %v96
  %130 = vmatprep.subr.bf16.mxu0 %v99
  %131 = vmatpush1.bf16.msra.mxu0 %v98
  %132 = vmatprep.subr.bf16.mxu0 %v101
  %133 = vmatpush1.bf16.msra.mxu0 %v100
  %134 = vmatprep.subr.bf16.mxu0 %v103
  %135 = vmatpush1.bf16.msra.mxu0 %v102
  %136 = vmatprep.subr.bf16.mxu0 %v105
  %137 = vmatpush1.bf16.msra.mxu0 %v104
  %138 = vmatprep.subr.bf16.mxu0 %v107
  %139 = vmatpush1.bf16.msra.mxu0 %v106
  %140 = vmatprep.subr.bf16.mxu0 %v109
  %141 = vmatpush1.bf16.msra.mxu0 %v108
  %142 = vmatprep.subr.bf16.mxu0 0
  %143 = vmatpush1.bf16.msra.mxu0 0
  %144 = vmatprep.subr.bf16.mxu0 0
  %145 = vmatpush1.bf16.msra.mxu0 0
  %146 = vmatprep.subr.bf16.mxu0 0
  %147 = vmatpush1.bf16.msra.mxu0 0
  %148 = vmatprep.subr.bf16.mxu0 0
  %149 = vmatpush1.bf16.msra.mxu0 0
  %150 = vmatprep.subr.bf16.mxu0 0
  %151 = vmatpush1.bf16.msra.mxu0 0
  %152 = vmatprep.subr.bf16.mxu0 0
  %153 = vmatpush1.bf16.msra.mxu0 0
  %154 = vmatprep.subr.bf16.mxu0 0
  %155 = vmatpush1.bf16.msra.mxu0 0
  %156 = vmatprep.subr.bf16.mxu0 0
  %157 = vmatpush1.bf16.msra.mxu0 0
  %158 = vmatprep.mubr.bf16.mxu0 0
  %159 = vmatmul.mubr.bf16.gmra.mrb[0].mxu0 %v44
  %v160 = vpop.f32.mrb[0].mxu0
  %v161 = vadd.f32 %v38, %v160
  %v162 = vpop.f32.mrb[0].mxu0
  %v163 = vpop.f32.mrb[0].mxu0
  %v164 = vadd.f32 %v38, %v163
  %v165 = vpop.f32.mrb[0].mxu0
  %166 = vdwg.mxu0
  %v167 = vmax.f32 %v161, 0.0
  %v168 = vmax.f32 %v164, 0.0
  %v169 = vpack.c.bf16 %v168, %v167
  %s170 = scalar_lea.vmem %s1, 128
  %v171 = vld [vmem:[%s170] sm:$0xff]
  %v172 = vld [vmem:[%s170 + $0x8] sm:$0xff]
  %v173 = vld [vmem:[%s170 + $0x10] sm:$0xff]
  %v174 = vld [vmem:[%s170 + $0x18] sm:$0xff]
  %v175 = vld [vmem:[%s170 + $0x20] sm:$0xff]
  %v176 = vld [vmem:[%s170 + $0x28] sm:$0xff]
  %v177 = vld [vmem:[%s170 + $0x30] sm:$0xff]
  %v178 = vld [vmem:[%s170 + $0x38] sm:$0xff]
  %v179 = vld [vmem:[%s170 + $0x40] sm:$0xff]
  %v180 = vld [vmem:[%s170 + $0x48] sm:$0xff]
  %v181 = vld [vmem:[%s170 + $0x50] sm:$0xff]
  %v182 = vld [vmem:[%s170 + $0x58] sm:$0xff]
  %v183 = vld [vmem:[%s170 + $0x60] sm:$0xff]
  %v184 = vld [vmem:[%s170 + $0x68] sm:$0xff]
  %v185 = vld [vmem:[%s170 + $0x70] sm:$0xff]
  %v186 = vld [vmem:[%s170 + $0x78] sm:$0xff]
  %s187 = scalar_lea.vmem %s2, 2
  %v188 = vld [vmem:[%s187] sm:$0x3]
  %v190 = vlaneseq
  %v191 = vshrl.u32 %v190, 7
  %v192 = vsub.s32 0, %v191
  %v193 = vrot.slane %v188, %v192
  %v211 = vunpack.c.l.b16 %v171
  %v212 = vunpack.c.h.b16 %v171
  %v213 = vunpack.c.l.b16 %v172
  %v214 = vunpack.c.h.b16 %v172
  %v215 = vunpack.c.l.b16 %v173
  %v216 = vunpack.c.h.b16 %v173
  %v217 = vunpack.c.l.b16 %v174
  %v218 = vunpack.c.h.b16 %v174
  %v219 = vunpack.c.l.b16 %v175
  %v220 = vunpack.c.h.b16 %v175
  %v221 = vunpack.c.l.b16 %v176
  %v222 = vunpack.c.h.b16 %v176
  %v223 = vunpack.c.l.b16 %v177
  %v224 = vunpack.c.h.b16 %v177
  %v225 = vunpack.c.l.b16 %v178
  %v226 = vunpack.c.h.b16 %v178
  %v227 = vunpack.c.l.b16 %v179
  %v228 = vunpack.c.h.b16 %v179
  %v229 = vunpack.c.l.b16 %v180
  %v230 = vunpack.c.h.b16 %v180
  %v231 = vunpack.c.l.b16 %v181
  %v232 = vunpack.c.h.b16 %v181
  %v233 = vunpack.c.l.b16 %v182
  %v234 = vunpack.c.h.b16 %v182
  %v235 = vunpack.c.l.b16 %v183
  %v236 = vunpack.c.h.b16 %v183
  %v237 = vunpack.c.l.b16 %v184
  %v238 = vunpack.c.h.b16 %v184
  %v239 = vunpack.c.l.b16 %v185
  %v240 = vunpack.c.h.b16 %v185
  %v241 = vunpack.c.l.b16 %v186
  %v242 = vunpack.c.h.b16 %v186
  %v243 = vpack.c.b16 %v213, %v211
  %v244 = vpack.c.b16 %v214, %v212
  %v245 = vpack.c.b16 %v217, %v215
  %v246 = vpack.c.b16 %v218, %v216
  %v247 = vpack.c.b16 %v221, %v219
  %v248 = vpack.c.b16 %v222, %v220
  %v249 = vpack.c.b16 %v225, %v223
  %v250 = vpack.c.b16 %v226, %v224
  %v251 = vpack.c.b16 %v229, %v227
  %v252 = vpack.c.b16 %v230, %v228
  %v253 = vpack.c.b16 %v233, %v231
  %v254 = vpack.c.b16 %v234, %v232
  %v255 = vpack.c.b16 %v237, %v235
  %v256 = vpack.c.b16 %v238, %v236
  %v257 = vpack.c.b16 %v241, %v239
  %v258 = vpack.c.b16 %v242, %v240
  %275 = vmatprep.subr.bf16.mxu0 %v244
  %276 = vmatpush1.bf16.msra.mxu0 %v243
  %277 = vmatprep.subr.bf16.mxu0 %v246
  %278 = vmatpush1.bf16.msra.mxu0 %v245
  %279 = vmatprep.subr.bf16.mxu0 %v248
  %280 = vmatpush1.bf16.msra.mxu0 %v247
  %281 = vmatprep.subr.bf16.mxu0 %v250
  %282 = vmatpush1.bf16.msra.mxu0 %v249
  %283 = vmatprep.subr.bf16.mxu0 %v252
  %284 = vmatpush1.bf16.msra.mxu0 %v251
  %285 = vmatprep.subr.bf16.mxu0 %v254
  %286 = vmatpush1.bf16.msra.mxu0 %v253
  %287 = vmatprep.subr.bf16.mxu0 %v256
  %288 = vmatpush1.bf16.msra.mxu0 %v255
  %289 = vmatprep.subr.bf16.mxu0 %v258
  %290 = vmatpush1.bf16.msra.mxu0 %v257
  %291 = vmatprep.subr.bf16.mxu0 0
  %292 = vmatpush1.bf16.msra.mxu0 0
  %293 = vmatprep.subr.bf16.mxu0 0
  %294 = vmatpush1.bf16.msra.mxu0 0
  %295 = vmatprep.subr.bf16.mxu0 0
  %296 = vmatpush1.bf16.msra.mxu0 0
  %297 = vmatprep.subr.bf16.mxu0 0
  %298 = vmatpush1.bf16.msra.mxu0 0
  %299 = vmatprep.subr.bf16.mxu0 0
  %300 = vmatpush1.bf16.msra.mxu0 0
  %301 = vmatprep.subr.bf16.mxu0 0
  %302 = vmatpush1.bf16.msra.mxu0 0
  %303 = vmatprep.subr.bf16.mxu0 0
  %304 = vmatpush1.bf16.msra.mxu0 0
  %305 = vmatprep.subr.bf16.mxu0 0
  %306 = vmatpush1.bf16.msra.mxu0 0
  %307 = vmatprep.mubr.bf16.mxu0 0
  %308 = vmatmul.mubr.bf16.gmra.mrb[0].mxu0 %v169
  %v309 = vpop.f32.mrb[0].mxu0
  %v310 = vadd.f32 %v193, %v309
  %v311 = vpop.f32.mrb[0].mxu0
  %v312 = vpop.f32.mrb[0].mxu0
  %v313 = vadd.f32 %v193, %v312
  %v314 = vpop.f32.mrb[0].mxu0
  %315 = vdwg.mxu0
  %v316 = vmax.f32 %v310, 0.0
  %v317 = vmax.f32 %v313, 0.0
  %v318 = vpack.c.bf16 %v317, %v316
  %s319 = scalar_lea.vmem %s1, 256
  %v320 = vld [vmem:[%s319] sm:$0xff]
  %v321 = vld [vmem:[%s319 + $0x8] sm:$0xff]
  %v322 = vld [vmem:[%s319 + $0x10] sm:$0xff]
  %v323 = vld [vmem:[%s319 + $0x18] sm:$0xff]
  %v324 = vld [vmem:[%s319 + $0x20] sm:$0xff]
  %v325 = vld [vmem:[%s319 + $0x28] sm:$0xff]
  %v326 = vld [vmem:[%s319 + $0x30] sm:$0xff]
  %v327 = vld [vmem:[%s319 + $0x38] sm:$0xff]
  %v328 = vld [vmem:[%s319 + $0x40] sm:$0xff]
  %v329 = vld [vmem:[%s319 + $0x48] sm:$0xff]
  %v330 = vld [vmem:[%s319 + $0x50] sm:$0xff]
  %v331 = vld [vmem:[%s319 + $0x58] sm:$0xff]
  %v332 = vld [vmem:[%s319 + $0x60] sm:$0xff]
  %v333 = vld [vmem:[%s319 + $0x68] sm:$0xff]
  %v334 = vld [vmem:[%s319 + $0x70] sm:$0xff]
  %v335 = vld [vmem:[%s319 + $0x78] sm:$0xff]
  %s336 = scalar_lea.vmem %s2, 4
  %v337 = vld [vmem:[%s336] sm:$0x3]
  %v339 = vlaneseq
  %v340 = vshrl.u32 %v339, 7
  %v341 = vsub.s32 0, %v340
  %v342 = vrot.slane %v337, %v341
  %v343 = vlaneseq
  %v344 = vshrl.u32 %v343, 7
  %v345 = vsub.s32 1, %v344
  %v346 = vrot.slane %v337, %v345
  %v365 = vunpack.c.l.b16 %v320
  %v366 = vunpack.c.h.b16 %v320
  %v367 = vunpack.c.l.b16 %v321
  %v368 = vunpack.c.h.b16 %v321
  %v369 = vunpack.c.l.b16 %v322
  %v370 = vunpack.c.h.b16 %v322
  %v371 = vunpack.c.l.b16 %v323
  %v372 = vunpack.c.h.b16 %v323
  %v373 = vunpack.c.l.b16 %v324
  %v374 = vunpack.c.h.b16 %v324
  %v375 = vunpack.c.l.b16 %v325
  %v376 = vunpack.c.h.b16 %v325
  %v377 = vunpack.c.l.b16 %v326
  %v378 = vunpack.c.h.b16 %v326
  %v379 = vunpack.c.l.b16 %v327
  %v380 = vunpack.c.h.b16 %v327
  %v381 = vunpack.c.l.b16 %v328
  %v382 = vunpack.c.h.b16 %v328
  %v383 = vunpack.c.l.b16 %v329
  %v384 = vunpack.c.h.b16 %v329
  %v385 = vunpack.c.l.b16 %v330
  %v386 = vunpack.c.h.b16 %v330
  %v387 = vunpack.c.l.b16 %v331
  %v388 = vunpack.c.h.b16 %v331
  %v389 = vunpack.c.l.b16 %v332
  %v390 = vunpack.c.h.b16 %v332
  %v391 = vunpack.c.l.b16 %v333
  %v392 = vunpack.c.h.b16 %v333
  %v393 = vunpack.c.l.b16 %v334
  %v394 = vunpack.c.h.b16 %v334
  %v395 = vunpack.c.l.b16 %v335
  %v396 = vunpack.c.h.b16 %v335
  %v397 = vpack.c.b16 %v367, %v365
  %v398 = vpack.c.b16 %v368, %v366
  %v399 = vpack.c.b16 %v371, %v369
  %v400 = vpack.c.b16 %v372, %v370
  %v401 = vpack.c.b16 %v375, %v373
  %v402 = vpack.c.b16 %v376, %v374
  %v403 = vpack.c.b16 %v379, %v377
  %v404 = vpack.c.b16 %v380, %v378
  %v405 = vpack.c.b16 %v383, %v381
  %v406 = vpack.c.b16 %v384, %v382
  %v407 = vpack.c.b16 %v387, %v385
  %v408 = vpack.c.b16 %v388, %v386
  %v409 = vpack.c.b16 %v391, %v389
  %v410 = vpack.c.b16 %v392, %v390
  %v411 = vpack.c.b16 %v395, %v393
  %v412 = vpack.c.b16 %v396, %v394
  %429 = vmatprep.subr.bf16.mxu0 %v398
  %430 = vmatpush1.bf16.msra.mxu0 %v397
  %431 = vmatprep.subr.bf16.mxu0 %v400
  %432 = vmatpush1.bf16.msra.mxu0 %v399
  %433 = vmatprep.subr.bf16.mxu0 %v402
  %434 = vmatpush1.bf16.msra.mxu0 %v401
  %435 = vmatprep.subr.bf16.mxu0 %v404
  %436 = vmatpush1.bf16.msra.mxu0 %v403
  %437 = vmatprep.subr.bf16.mxu0 %v406
  %438 = vmatpush1.bf16.msra.mxu0 %v405
  %439 = vmatprep.subr.bf16.mxu0 %v408
  %440 = vmatpush1.bf16.msra.mxu0 %v407
  %441 = vmatprep.subr.bf16.mxu0 %v410
  %442 = vmatpush1.bf16.msra.mxu0 %v409
  %443 = vmatprep.subr.bf16.mxu0 %v412
  %444 = vmatpush1.bf16.msra.mxu0 %v411
  %445 = vmatprep.subr.bf16.mxu0 0
  %446 = vmatpush1.bf16.msra.mxu0 0
  %447 = vmatprep.subr.bf16.mxu0 0
  %448 = vmatpush1.bf16.msra.mxu0 0
  %449 = vmatprep.subr.bf16.mxu0 0
  %450 = vmatpush1.bf16.msra.mxu0 0
  %451 = vmatprep.subr.bf16.mxu0 0
  %452 = vmatpush1.bf16.msra.mxu0 0
  %453 = vmatprep.subr.bf16.mxu0 0
  %454 = vmatpush1.bf16.msra.mxu0 0
  %455 = vmatprep.subr.bf16.mxu0 0
  %456 = vmatpush1.bf16.msra.mxu0 0
  %457 = vmatprep.subr.bf16.mxu0 0
  %458 = vmatpush1.bf16.msra.mxu0 0
  %459 = vmatprep.subr.bf16.mxu0 0
  %460 = vmatpush1.bf16.msra.mxu0 0
  %461 = vmatprep.mubr.bf16.mxu0 0
  %462 = vmatmul.mubr.bf16.gmra.mrb[0].mxu0 %v318
  %v463 = vpop.f32.mrb[0].mxu0
  %v464 = vadd.f32 %v342, %v463
  %v465 = vpop.f32.mrb[0].mxu0
  %v466 = vadd.f32 %v346, %v465
  %v467 = vpop.f32.mrb[0].mxu0
  %v468 = vadd.f32 %v342, %v467
  %v469 = vpop.f32.mrb[0].mxu0
  %v470 = vadd.f32 %v346, %v469
  %471 = vdwg.mxu0
  %472 = vst [vmem:[%s3] sm:$0xff] %v464
  %473 = vst [vmem:[%s3 + $0x8] sm:$0xff] %v466
  %474 = vst [vmem:[%s3 + $0x10] sm:$0xff] %v468
  %475 = vst [vmem:[%s3 + $0x18] sm:$0xff] %v470
  // Predicated region
  $region14: #{forward.1} parent=0 // pred_check
    _
  $region15: #{forward.1} parent=0 // pred_check_branch
    %477 = sbr.rel (0) target = $region17
  $region16: #{forward.1} parent=0 // pred_region
    _
  $region17: #{forward.1} parent=0 // pred_fallthru
    _
  // Predicated region
  $region18: #{forward.1} parent=0 // pred_check
    _
  $region19: #{forward.1} parent=0 // pred_check_branch
    %479 = sbr.rel (0) target = $region21
  $region20: #{forward.1} parent=0 // pred_region
    _
  $region21: #{forward.1} parent=0 // pred_fallthru
    _

</llo_original>
